<compile_context>
chip_gen: v7x
topology: tpu7x:2x2x1
jax: 0.10.0
libtpu: 0.0.40
codegen_flags: <defaults>
</compile_context>

<pallas_src>
import functools

import jax
import jax.numpy as jnp
from jax.experimental import pallas as pl
from jax.experimental.pallas import tpu as pltpu


# ----------------------------- Pallas kernel --------------------------------
def rnn_critic_kernel(
    x_ref, h_ref,                 # activations: (bb, F), (bb, HP)
    w1_ref,                       # fc1 weight (F, HP)
    wi_ref, wh_ref,               # fused GRU weights (HP, 3*HP)
    bg_ref,                       # fused GRU biases (2, 3*HP): row0 = b_i, row1 = b_h
    misc_ref,                     # (5, HP): [b1; ln_w; ln_b; w2_row; lane_mask]
    b2_ref,                       # (1, 1) scalar in SMEM
    v_ref, hh_ref,                # outputs: (bb, 1), (bb, HP)
    *, hidden_dim,
):
    hp = h_ref.shape[-1]          # padded hidden width (static)

    x = x_ref[...]
    h = h_ref[...]

    b1    = misc_ref[0:1, :]
    ln_w  = misc_ref[1:2, :]
    ln_b  = misc_ref[2:3, :]
    w2    = misc_ref[3:4, :]
    lmask = misc_ref[4:5, :]
    bi    = bg_ref[0:1, :]
    bh    = bg_ref[1:2, :]

    # fc1 + ReLU  (padded output lanes stay exactly 0: zero weight cols, zero bias)
    a1 = jnp.maximum(
        jnp.dot(x, w1_ref[...], preferred_element_type=jnp.float32) + b1, 0.0)

    # GRUCell (PyTorch semantics), two fused matmuls instead of six:
    #   gi = [i_r | i_z | i_n],  gh = [h_r | h_z | h_n]
    gi = jnp.dot(a1, wi_ref[...], preferred_element_type=jnp.float32) + bi
    gh = jnp.dot(h,  wh_ref[...], preferred_element_type=jnp.float32) + bh

    r = jax.nn.sigmoid(gi[:, 0 * hp:1 * hp] + gh[:, 0 * hp:1 * hp])
    z = jax.nn.sigmoid(gi[:, 1 * hp:2 * hp] + gh[:, 1 * hp:2 * hp])
    n = jnp.tanh(gi[:, 2 * hp:3 * hp] + r * gh[:, 2 * hp:3 * hp])
    hh = (1.0 - z) * n + z * h            # padded lanes: (1-.5)*0 + .5*0 == 0

    # LayerNorm over the true hidden_dim (padded lanes of hh are exact zeros;
    # lmask removes the -mean contribution of padded lanes from the variance).
    inv_h = jnp.float32(1.0 / hidden_dim)
    mean = jnp.sum(hh, axis=-1, keepdims=True) * inv_h
    cent = (hh - mean) * lmask
    var = jnp.sum(cent * cent, axis=-1, keepdims=True) * inv_h
    xn = cent * jax.lax.rsqrt(var + 1e-5)
    y = xn * ln_w + ln_b                  # padded lanes of ln_w/ln_b are 0 -> y_pad = 0

    # fc2 as VPU multiply + cross-lane (XLU) reduce; no MXU push, no 1-lane matmul.
    v_ref[...] = jnp.sum(y * w2, axis=-1, keepdims=True) + b2_ref[0, 0]
    hh_ref[...] = hh


# --------------------------- host-side param packing -------------------------
def pack_params(p, hidden_dim):
    """Fuse/pad raw per-gate parameters into the 6 kernel operands (call once)."""
    H = hidden_dim
    HP = ((H + 127) // 128) * 128         # lane-dense hidden width

    def pad_cols(a):                      # (r, H) -> (r, HP)
        return jnp.pad(a, ((0, 0), (0, HP - H)))

    def pad_sq(a):                        # (H, H) -> (HP, HP)
        return jnp.pad(a, ((0, HP - H), (0, HP - H)))

    w1 = pad_cols(p["w1"])                                            # (F, HP)
    wi = jnp.concatenate([pad_sq(p["w_ir"]), pad_sq(p["w_iz"]), pad_sq(p["w_in"])], 1)
    wh = jnp.concatenate([pad_sq(p["w_hr"]), pad_sq(p["w_hz"]), pad_sq(p["w_hn"])], 1)
    bi = jnp.concatenate([pad_cols(p["b_ir"]), pad_cols(p["b_iz"]), pad_cols(p["b_in"])], 1)
    bh = jnp.concatenate([pad_cols(p["b_hr"]), pad_cols(p["b_hz"]), pad_cols(p["b_hn"])], 1)
    b_gates = jnp.concatenate([bi, bh], axis=0).astype(jnp.float32)   # (2, 3*HP)

    lane_mask = jnp.concatenate(
        [jnp.ones((1, H), jnp.float32), jnp.zeros((1, HP - H), jnp.float32)], axis=1)
    misc = jnp.concatenate(
        [pad_cols(p["b1"]), pad_cols(p["ln_w"]), pad_cols(p["ln_b"]),
         pad_cols(p["w2"].T), lane_mask], axis=0).astype(jnp.float32) # (5, HP)

    b2 = p["b2"].reshape(1, 1).astype(jnp.float32)                    # SMEM scalar

    return dict(w1=w1.astype(jnp.float32), wi=wi.astype(jnp.float32),
                wh=wh.astype(jnp.float32), b_gates=b_gates, misc=misc, b2=b2)


# ------------------------------ host wrapper ---------------------------------
@functools.partial(jax.jit, static_argnames=("n_agents", "hidden_dim"))
def rnn_critic_forward(obs, actions, states, hidden_states, packed, n_agents, hidden_dim):
    """Reproduces RnnCritic.forward (use_layer_norm=True, 'state' in critic_inputs)."""
    b = obs.shape[0]
    H = hidden_dim
    HP = packed["misc"].shape[1]
    F = packed["w1"].shape[0]

    # _build_inputs: cat([obs, actions, states] flattened per batch row)
    inputs = jnp.concatenate(
        [obs.reshape(b, -1), actions.reshape(b, -1), states.reshape(b, -1)], axis=-1
    ).astype(jnp.float32)
    assert inputs.shape[1] == F
    h = hidden_states.reshape(-1, H).astype(jnp.float32)

    # Pad batch to a sublane multiple and tile it over a parallel grid axis.
    block_b = min(max(8, ((b + 7) // 8) * 8), 256)
    bp = ((b + block_b - 1) // block_b) * block_b
    x_pad = jnp.pad(inputs, ((0, bp - b), (0, 0)))
    h_pad = jnp.pad(h, ((0, bp - b), (0, HP - H)))     # padded lanes/rows are zeros

    kernel = functools.partial(rnn_critic_kernel, hidden_dim=H)

    v_pad, hh_pad = pl.pallas_call(
        kernel,
        grid=(bp // block_b,),
        in_specs=[
            pl.BlockSpec((block_b, F), lambda i: (i, 0)),      # x (batch-tiled)
            pl.BlockSpec((block_b, HP), lambda i: (i, 0)),     # h (batch-tiled)
            pl.BlockSpec((F, HP), lambda i: (0, 0)),           # w1
            pl.BlockSpec((HP, 3 * HP), lambda i: (0, 0)),      # fused W_i
            pl.BlockSpec((HP, 3 * HP), lambda i: (0, 0)),      # fused W_h
            pl.BlockSpec((2, 3 * HP), lambda i: (0, 0)),       # fused gate biases
            pl.BlockSpec((5, HP), lambda i: (0, 0)),           # packed misc params
            pl.BlockSpec((1, 1), lambda i: (0, 0),
                         memory_space=pltpu.MemorySpace.SMEM), # b2 scalar
        ],
        out_specs=(
            pl.BlockSpec((block_b, 1), lambda i: (i, 0)),
            pl.BlockSpec((block_b, HP), lambda i: (i, 0)),
        ),
        out_shape=(
            jax.ShapeDtypeStruct((bp, 1), jnp.float32),
            jax.ShapeDtypeStruct((bp, HP), jnp.float32),
        ),
        # hh reuses h's HBM buffer (next rollout step's h_in), saving a writeback.
        input_output_aliases={1: 1},
        compiler_params=pltpu.CompilerParams(
            dimension_semantics=("parallel",),
        ),
    )(x_pad, h_pad, packed["w1"], packed["wi"], packed["wh"],
      packed["b_gates"], packed["misc"], packed["b2"])

    v = v_pad[:b]
    hh = hh_pad[:b, :H]
    # forward returns (v, hh.view(b, a, -1))
    return v, hh.reshape(b, n_agents, -1)


# --------------------------- pure-JAX reference -------------------------------
def reference_forward(obs, actions, states, hidden_states, params, n_agents):
    b = obs.shape[0]
    hidden_dim = params["w_hr"].shape[0]
    inputs = jnp.concatenate(
        [obs.reshape(b, -1), actions.reshape(b, -1), states.reshape(b, -1)], axis=-1
    )
    h = hidden_states.reshape(-1, hidden_dim)

    a1 = jnp.maximum(inputs @ params["w1"] + params["b1"], 0.0)
    r = jax.nn.sigmoid(a1 @ params["w_ir"] + params["b_ir"] + h @ params["w_hr"] + params["b_hr"])
    z = jax.nn.sigmoid(a1 @ params["w_iz"] + params["b_iz"] + h @ params["w_hz"] + params["b_hz"])
    n = jnp.tanh(a1 @ params["w_in"] + params["b_in"] + r * (h @ params["w_hn"] + params["b_hn"]))
    hh = (1.0 - z) * n + z * h

    mean = jnp.mean(hh, axis=-1, keepdims=True)
    var = jnp.mean((hh - mean) ** 2, axis=-1, keepdims=True)
    y = (hh - mean) / jnp.sqrt(var + 1e-5) * params["ln_w"] + params["ln_b"]
    v = y @ params["w2"] + params["b2"]
    return v, hh.reshape(b, n_agents, -1)


# ------------------------------- param init ----------------------------------
def init_params(key, input_shape, hidden_dim):
    ks = jax.random.split(key, 12)

    def lin(k, fan_in, fan_out):
        bound = 1.0 / jnp.sqrt(fan_in)
        kw, kb = jax.random.split(k)
        w = jax.random.uniform(kw, (fan_in, fan_out), jnp.float32, -bound, bound)
        b = jax.random.uniform(kb, (1, fan_out), jnp.float32, -bound, bound)
        return w, b

    w1, b1 = lin(ks[0], input_shape, hidden_dim)
    w2, b2 = lin(ks[1], hidden_dim, 1)

    w_ir, b_ir = lin(ks[2], hidden_dim, hidden_dim)
    w_iz, b_iz = lin(ks[3], hidden_dim, hidden_dim)
    w_in, b_in = lin(ks[4], hidden_dim, hidden_dim)
    w_hr, b_hr = lin(ks[5], hidden_dim, hidden_dim)
    w_hz, b_hz = lin(ks[6], hidden_dim, hidden_dim)
    w_hn, b_hn = lin(ks[7], hidden_dim, hidden_dim)

    ln_w = jnp.ones((1, hidden_dim), jnp.float32)
    ln_b = jnp.zeros((1, hidden_dim), jnp.float32)

    return dict(
        w1=w1, b1=b1, w2=w2, b2=b2,
        w_ir=w_ir, w_iz=w_iz, w_in=w_in,
        w_hr=w_hr, w_hz=w_hz, w_hn=w_hn,
        b_ir=b_ir, b_iz=b_iz, b_in=b_in,
        b_hr=b_hr, b_hz=b_hz, b_hn=b_hn,
        ln_w=ln_w, ln_b=ln_b,
    )


if __name__ == "__main__":
    # args: obs_shape=10, n_agents=4, n_actions=5, state_shape=12, hidden_dim=32,
    #       critic_inputs contains 'state', use_layer_norm=True
    b, n_agents = 2, 4
    obs_shape, n_actions, state_shape, hidden_dim = 10, 5, 12, 32
    input_shape = obs_shape * n_agents + state_shape + n_actions * n_agents  # 72

    key = jax.random.PRNGKey(0)
    k_obs, k_act, k_state, k_h, k_param = jax.random.split(key, 5)

    obs = jax.random.normal(k_obs, (b, n_agents, obs_shape), jnp.float32)
    actions = jax.random.normal(k_act, (b, n_agents, n_actions), jnp.float32)
    states = jax.random.normal(k_state, (b, state_shape), jnp.float32)
    hidden_states = jax.random.normal(k_h, (b, hidden_dim), jnp.float32)

    params = init_params(k_param, input_shape, hidden_dim)
    packed = pack_params(params, hidden_dim)   # one-time host-side fuse/pad

    v, hh = rnn_critic_forward(obs, actions, states, hidden_states, packed,
                               n_agents=n_agents, hidden_dim=hidden_dim)
    jax.block_until_ready((v, hh))

    v_ref, hh_ref = reference_forward(obs, actions, states, hidden_states, params, n_agents)
    assert v.shape == (b, 1) and hh.shape == (b, n_agents, hidden_dim // n_agents)
    assert jnp.allclose(v, v_ref, atol=1e-5, rtol=1e-5)
    assert jnp.allclose(hh, hh_ref, atol=1e-5, rtol=1e-5)

    print("KERNEL_OK")
</pallas_src>

<mosaic_0001>
module attributes {stable_mosaic.version = 11 : i64} {
  func.func @rnn_critic_kernel(%arg0: i32, %arg1: memref<8x72xf32, #tpu.memory_space<vmem>>, %arg2: memref<8x128xf32, #tpu.memory_space<vmem>>, %arg3: memref<72x128xf32, #tpu.memory_space<vmem>>, %arg4: memref<128x384xf32, #tpu.memory_space<vmem>>, %arg5: memref<128x384xf32, #tpu.memory_space<vmem>>, %arg6: memref<2x384xf32, #tpu.memory_space<vmem>>, %arg7: memref<5x128xf32, #tpu.memory_space<vmem>>, %arg8: memref<1x1xf32, #tpu.memory_space<smem>>, %arg9: memref<8x1xf32, #tpu.memory_space<vmem>>, %arg10: memref<8x128xf32, #tpu.memory_space<vmem>>) attributes {dimension_semantics = [#tpu.dimension_semantics<parallel>], iteration_bounds = array<i64: 1>, scalar_prefetch = 0 : i64, scratch_operands = 0 : i64, tpu.core_type = #tpu.core_type<tc>, window_params = [{transform_indices = @transform_0, window_bounds = array<i64: 8, 72>}, {transform_indices = @transform_1, window_bounds = array<i64: 8, 128>}, {pipeline_mode = #tpu.pipeline_mode<synchronous>, transform_indices = @transform_2, window_bounds = array<i64: 72, 128>}, {pipeline_mode = #tpu.pipeline_mode<synchronous>, transform_indices = @transform_3, window_bounds = array<i64: 128, 384>}, {pipeline_mode = #tpu.pipeline_mode<synchronous>, transform_indices = @transform_4, window_bounds = array<i64: 128, 384>}, {pipeline_mode = #tpu.pipeline_mode<synchronous>, transform_indices = @transform_5, window_bounds = array<i64: 2, 384>}, {pipeline_mode = #tpu.pipeline_mode<synchronous>, transform_indices = @transform_6, window_bounds = array<i64: 5, 128>}, {transform_indices = @transform_7, window_bounds = array<i64: 1, 1>}, {transform_indices = @transform_8, window_bounds = array<i64: 8, 1>}, {transform_indices = @transform_9, window_bounds = array<i64: 8, 128>}]} {
    %c0 = arith.constant 0 : index
    %c0_0 = arith.constant 0 : index
    %0 = vector.load %arg1[%c0, %c0_0] : memref<8x72xf32, #tpu.memory_space<vmem>>, vector<8x72xf32>
    %c0_1 = arith.constant 0 : index
    %c0_2 = arith.constant 0 : index
    %1 = vector.load %arg2[%c0_1, %c0_2] : memref<8x128xf32, #tpu.memory_space<vmem>>, vector<8x128xf32>
    %c0_3 = arith.constant 0 : index
    %c0_4 = arith.constant 0 : index
    %2 = vector.load %arg7[%c0_3, %c0_4] : memref<5x128xf32, #tpu.memory_space<vmem>>, vector<1x128xf32>
    %c1 = arith.constant 1 : index
    %c0_5 = arith.constant 0 : index
    %3 = vector.load %arg7[%c1, %c0_5] : memref<5x128xf32, #tpu.memory_space<vmem>>, vector<1x128xf32>
    %c2 = arith.constant 2 : index
    %c0_6 = arith.constant 0 : index
    %4 = vector.load %arg7[%c2, %c0_6] : memref<5x128xf32, #tpu.memory_space<vmem>>, vector<1x128xf32>
    %c3 = arith.constant 3 : index
    %c0_7 = arith.constant 0 : index
    %5 = vector.load %arg7[%c3, %c0_7] : memref<5x128xf32, #tpu.memory_space<vmem>>, vector<1x128xf32>
    %c4 = arith.constant 4 : index
    %c0_8 = arith.constant 0 : index
    %6 = vector.load %arg7[%c4, %c0_8] : memref<5x128xf32, #tpu.memory_space<vmem>>, vector<1x128xf32>
    %c0_9 = arith.constant 0 : index
    %c0_10 = arith.constant 0 : index
    %7 = vector.load %arg6[%c0_9, %c0_10] : memref<2x384xf32, #tpu.memory_space<vmem>>, vector<1x384xf32>
    %c1_11 = arith.constant 1 : index
    %c0_12 = arith.constant 0 : index
    %8 = vector.load %arg6[%c1_11, %c0_12] : memref<2x384xf32, #tpu.memory_space<vmem>>, vector<1x384xf32>
    %c0_13 = arith.constant 0 : index
    %c0_14 = arith.constant 0 : index
    %9 = vector.load %arg3[%c0_13, %c0_14] : memref<72x128xf32, #tpu.memory_space<vmem>>, vector<72x128xf32>
    %cst = arith.constant dense<0.000000e+00> : vector<8x128xf32>
    %10 = tpu.matmul %0, %9, %cst {dimension_numbers = #tpu.dot_dimension_numbers<[1], [0], [0], [1], [0, 0, 1, 1], [], []>} : vector<8x72xf32>, vector<72x128xf32>, vector<8x128xf32> -> vector<8x128xf32>
    %11 = vector.broadcast %2 : vector<1x128xf32> to vector<8x128xf32>
    %12 = arith.addf %10, %11 : vector<8x128xf32>
    %cst_15 = arith.constant 0.000000e+00 : f32
    %13 = vector.broadcast %cst_15 : f32 to vector<8x128xf32>
    %14 = arith.maximumf %12, %13 : vector<8x128xf32>
    %c0_16 = arith.constant 0 : index
    %c0_17 = arith.constant 0 : index
    %15 = vector.load %arg4[%c0_16, %c0_17] : memref<128x384xf32, #tpu.memory_space<vmem>>, vector<128x384xf32>
    %cst_18 = arith.constant dense<0.000000e+00> : vector<8x384xf32>
    %16 = tpu.matmul %14, %15, %cst_18 {dimension_numbers = #tpu.dot_dimension_numbers<[1], [0], [0], [1], [0, 0, 1, 1], [], []>} : vector<8x128xf32>, vector<128x384xf32>, vector<8x384xf32> -> vector<8x384xf32>
    %17 = vector.broadcast %7 : vector<1x384xf32> to vector<8x384xf32>
    %18 = arith.addf %16, %17 : vector<8x384xf32>
    %c0_19 = arith.constant 0 : index
    %c0_20 = arith.constant 0 : index
    %19 = vector.load %arg5[%c0_19, %c0_20] : memref<128x384xf32, #tpu.memory_space<vmem>>, vector<128x384xf32>
    %cst_21 = arith.constant dense<0.000000e+00> : vector<8x384xf32>
    %20 = tpu.matmul %1, %19, %cst_21 {dimension_numbers = #tpu.dot_dimension_numbers<[1], [0], [0], [1], [0, 0, 1, 1], [], []>} : vector<8x128xf32>, vector<128x384xf32>, vector<8x384xf32> -> vector<8x384xf32>
    %21 = vector.broadcast %8 : vector<1x384xf32> to vector<8x384xf32>
    %22 = arith.addf %20, %21 : vector<8x384xf32>
    %23 = vector.extract_strided_slice %18 {offsets = [0, 0], sizes = [8, 128], strides = [1, 1]} : vector<8x384xf32> to vector<8x128xf32>
    %24 = vector.extract_strided_slice %22 {offsets = [0, 0], sizes = [8, 128], strides = [1, 1]} : vector<8x384xf32> to vector<8x128xf32>
    %25 = arith.addf %23, %24 : vector<8x128xf32>
    %26 = arith.negf %25 : vector<8x128xf32>
    %27 = math.exp %26 : vector<8x128xf32>
    %cst_22 = arith.constant 1.000000e+00 : f32
    %28 = vector.broadcast %cst_22 : f32 to vector<8x128xf32>
    %29 = arith.addf %28, %27 : vector<8x128xf32>
    %30 = arith.divf %28, %29 : vector<8x128xf32>
    %31 = vector.extract_strided_slice %18 {offsets = [0, 128], sizes = [8, 128], strides = [1, 1]} : vector<8x384xf32> to vector<8x128xf32>
    %32 = vector.extract_strided_slice %22 {offsets = [0, 128], sizes = [8, 128], strides = [1, 1]} : vector<8x384xf32> to vector<8x128xf32>
    %33 = arith.addf %31, %32 : vector<8x128xf32>
    %34 = arith.negf %33 : vector<8x128xf32>
    %35 = math.exp %34 : vector<8x128xf32>
    %cst_23 = arith.constant 1.000000e+00 : f32
    %36 = vector.broadcast %cst_23 : f32 to vector<8x128xf32>
    %37 = arith.addf %36, %35 : vector<8x128xf32>
    %38 = arith.divf %36, %37 : vector<8x128xf32>
    %39 = vector.extract_strided_slice %18 {offsets = [0, 256], sizes = [8, 128], strides = [1, 1]} : vector<8x384xf32> to vector<8x128xf32>
    %40 = vector.extract_strided_slice %22 {offsets = [0, 256], sizes = [8, 128], strides = [1, 1]} : vector<8x384xf32> to vector<8x128xf32>
    %41 = arith.mulf %30, %40 : vector<8x128xf32>
    %42 = arith.addf %39, %41 : vector<8x128xf32>
    %43 = math.tanh %42 : vector<8x128xf32>
    %cst_24 = arith.constant 1.000000e+00 : f32
    %44 = vector.broadcast %cst_24 : f32 to vector<8x128xf32>
    %45 = arith.subf %44, %38 : vector<8x128xf32>
    %46 = arith.mulf %45, %43 : vector<8x128xf32>
    %47 = arith.mulf %38, %1 : vector<8x128xf32>
    %48 = arith.addf %46, %47 : vector<8x128xf32>
    %cst_25 = arith.constant dense<0.000000e+00> : vector<8xf32>
    %49 = vector.multi_reduction <add>, %48, %cst_25 [1] : vector<8x128xf32> to vector<8xf32>
    %50 = vector.shape_cast %49 : vector<8xf32> to vector<8x1xf32>
    %cst_26 = arith.constant 3.125000e-02 : f32
    %51 = vector.broadcast %cst_26 : f32 to vector<8x1xf32>
    %52 = arith.mulf %50, %51 : vector<8x1xf32>
    %53 = vector.broadcast %52 : vector<8x1xf32> to vector<8x128xf32>
    %54 = arith.subf %48, %53 : vector<8x128xf32>
    %55 = vector.broadcast %6 : vector<1x128xf32> to vector<8x128xf32>
    %56 = arith.mulf %54, %55 : vector<8x128xf32>
    %57 = arith.mulf %56, %56 : vector<8x128xf32>
    %cst_27 = arith.constant dense<0.000000e+00> : vector<8xf32>
    %58 = vector.multi_reduction <add>, %57, %cst_27 [1] : vector<8x128xf32> to vector<8xf32>
    %59 = vector.shape_cast %58 : vector<8xf32> to vector<8x1xf32>
    %cst_28 = arith.constant 3.125000e-02 : f32
    %60 = vector.broadcast %cst_28 : f32 to vector<8x1xf32>
    %61 = arith.mulf %59, %60 : vector<8x1xf32>
    %cst_29 = arith.constant 9.99999974E-6 : f32
    %62 = vector.broadcast %cst_29 : f32 to vector<8x1xf32>
    %63 = arith.addf %61, %62 : vector<8x1xf32>
    %64 = math.rsqrt %63 : vector<8x1xf32>
    %65 = vector.broadcast %64 : vector<8x1xf32> to vector<8x128xf32>
    %66 = arith.mulf %56, %65 : vector<8x128xf32>
    %67 = vector.broadcast %3 : vector<1x128xf32> to vector<8x128xf32>
    %68 = arith.mulf %66, %67 : vector<8x128xf32>
    %69 = vector.broadcast %4 : vector<1x128xf32> to vector<8x128xf32>
    %70 = arith.addf %68, %69 : vector<8x128xf32>
    %71 = vector.broadcast %5 : vector<1x128xf32> to vector<8x128xf32>
    %72 = arith.mulf %70, %71 : vector<8x128xf32>
    %cst_30 = arith.constant dense<0.000000e+00> : vector<8xf32>
    %73 = vector.multi_reduction <add>, %72, %cst_30 [1] : vector<8x128xf32> to vector<8xf32>
    %74 = vector.shape_cast %73 : vector<8xf32> to vector<8x1xf32>
    %c0_31 = arith.constant 0 : index
    %c0_32 = arith.constant 0 : index
    %75 = memref.load %arg8[%c0_31, %c0_32] : memref<1x1xf32, #tpu.memory_space<smem>>
    %76 = vector.broadcast %75 : f32 to vector<8x1xf32>
    %77 = arith.addf %74, %76 : vector<8x1xf32>
    %c0_33 = arith.constant 0 : index
    %c0_34 = arith.constant 0 : index
    %78 = vector.load %arg9[%c0_33, %c0_34] : memref<8x1xf32, #tpu.memory_space<vmem>>, vector<8x1xf32>
    tpu.vector_store %arg9[%c0_33, %c0_34], %77 {strides = array<i32>} : memref<8x1xf32, #tpu.memory_space<vmem>>, vector<8x1xf32>,
    %c0_35 = arith.constant 0 : index
    %c0_36 = arith.constant 0 : index
    %79 = vector.load %arg10[%c0_35, %c0_36] : memref<8x128xf32, #tpu.memory_space<vmem>>, vector<8x128xf32>
    tpu.vector_store %arg10[%c0_35, %c0_36], %48 {strides = array<i32>} : memref<8x128xf32, #tpu.memory_space<vmem>>, vector<8x128xf32>,
    return
  }
  func.func @transform_0(%arg0: i32) -> (i32, i32) {
    %c0_i32 = arith.constant 0 : i32
    %c0_i32_0 = arith.constant 0 : i32
    return %arg0, %c0_i32 : i32, i32
  }
  func.func @transform_1(%arg0: i32) -> (i32, i32) {
    %c0_i32 = arith.constant 0 : i32
    %c0_i32_0 = arith.constant 0 : i32
    return %arg0, %c0_i32 : i32, i32
  }
  func.func @transform_2(%arg0: i32) -> (i32, i32) {
    %c0_i32 = arith.constant 0 : i32
    %c0_i32_0 = arith.constant 0 : i32
    %c0_i32_1 = arith.constant 0 : i32
    return %c0_i32, %c0_i32_0 : i32, i32
  }
  func.func @transform_3(%arg0: i32) -> (i32, i32) {
    %c0_i32 = arith.constant 0 : i32
    %c0_i32_0 = arith.constant 0 : i32
    %c0_i32_1 = arith.constant 0 : i32
    return %c0_i32, %c0_i32_0 : i32, i32
  }
  func.func @transform_4(%arg0: i32) -> (i32, i32) {
    %c0_i32 = arith.constant 0 : i32
    %c0_i32_0 = arith.constant 0 : i32
    %c0_i32_1 = arith.constant 0 : i32
    return %c0_i32, %c0_i32_0 : i32, i32
  }
  func.func @transform_5(%arg0: i32) -> (i32, i32) {
    %c0_i32 = arith.constant 0 : i32
    %c0_i32_0 = arith.constant 0 : i32
    %c0_i32_1 = arith.constant 0 : i32
    return %c0_i32, %c0_i32_0 : i32, i32
  }
  func.func @transform_6(%arg0: i32) -> (i32, i32) {
    %c0_i32 = arith.constant 0 : i32
    %c0_i32_0 = arith.constant 0 : i32
    %c0_i32_1 = arith.constant 0 : i32
    return %c0_i32, %c0_i32_0 : i32, i32
  }
  func.func @transform_7(%arg0: i32) -> (i32, i32) {
    %c0_i32 = arith.constant 0 : i32
    %c0_i32_0 = arith.constant 0 : i32
    %c0_i32_1 = arith.constant 0 : i32
    return %c0_i32, %c0_i32_0 : i32, i32
  }
  func.func @transform_8(%arg0: i32) -> (i32, i32) {
    %c0_i32 = arith.constant 0 : i32
    %c0_i32_0 = arith.constant 0 : i32
    return %arg0, %c0_i32 : i32, i32
  }
  func.func @transform_9(%arg0: i32) -> (i32, i32) {
    %c0_i32 = arith.constant 0 : i32
    %c0_i32_0 = arith.constant 0 : i32
    return %arg0, %c0_i32 : i32, i32
  }
}

</mosaic_0001>

<llo_original>
// kernel: rnn_critic_forward.1
$region0: #{rnn_critic_forward.1}
  #allocation0 [shape = 'u32[]', space=smem, size = 0x4, offset = 0x4, fixed_abs, tag = 'smem constant byte address 0x4 - core index']
  #allocation1 [shape = 'u32[144,128]{1,0:T(1,128)}', space=vmem, size = 0x12000, scoped, tag = 'internal scratch']
  #allocation2 [shape = 'f32[1,1]{1,0:T(1,128)S(6)}', space=smem, size = 0x200, scoped, tag = 'scoped memory for rnn_critic_forward.1']
  %s0 = inlined_call_operand.vmem [shape: f32[8,72], index: 0, kind: input, shape index: {}]
  %s1 = inlined_call_operand.vmem [shape: f32[8,128], index: 1, kind: input, shape index: {}, may-alias: {1,9}]
  %s2 = inlined_call_operand.hbm [shape: f32[72,128], index: 2, kind: input, shape index: {}]
  %s3 = inlined_call_operand.hbm [shape: f32[128,384], index: 3, kind: input, shape index: {}]
  %s4 = inlined_call_operand.hbm [shape: f32[128,384], index: 4, kind: input, shape index: {}]
  %s5 = inlined_call_operand.vmem [shape: f32[2,384], index: 5, kind: input, shape index: {}]
  %s6 = inlined_call_operand.vmem [shape: f32[5,128], index: 6, kind: input, shape index: {}]
  %s7 = inlined_call_operand.<no memory space> [shape: f32[1,1], index: 7, kind: input, shape index: {}]
  %s8 = inlined_call_operand.vmem [shape: f32[8,1], index: 8, kind: output, shape index: {0}]
  %s9 = inlined_call_operand.vmem [shape: f32[8,128], index: 9, kind: output, shape index: {1}, may-alias: {1,9}]
  %10 = xla_tuple %s8, %s9
  %s11 = sld [smem:[#allocation0]]
  $region62: #{rnn_critic_forward.1} parent=0
    _
  %s13 = ssub.s32 1, %s11
  %s14 = scalar_select 0, %s13, %s11
  %15 = sst [smem:[#allocation2]] %s7
  $region1: #{rnn_critic_forward.1} parent=0
    #allocation3 [shape = 'u8[36864]{0}', space=vmem, size = 0x9000, scoped, tag = 'input window, operand 2, single buffered']
    #allocation4 [shape = 's32[1]{0}', space=sflag, size = 0x4, scoped, tag = 'scoped memory for rnn_critic_forward.1']
    #allocation5 [shape = 'u8[196608]{0}', space=vmem, size = 0x30000, scoped, tag = 'input window, operand 3, single buffered']
    #allocation6 [shape = 's32[1]{0}', space=sflag, size = 0x4, scoped, tag = 'scoped memory for rnn_critic_forward.1']
    #allocation7 [shape = 'u8[196608]{0}', space=vmem, size = 0x30000, scoped, tag = 'input window, operand 4, single buffered']
    %16 = vsyncpa [#allocation4], 0
    %17 = vsyncpa [#allocation6], 0
    // Predicated region
    $region2: #{rnn_critic_forward.1} parent=1 // pred_check
      _
    $region3: #{rnn_critic_forward.1} parent=1 // pred_check_branch
      %19 = sbr.rel (0) target = $region5
    $region4: #{rnn_critic_forward.1} parent=1 // pred_region
      _
    $region5: #{rnn_critic_forward.1} parent=1 // pred_fallthru
      _
    // Predicated region
    $region6: #{rnn_critic_forward.1} parent=1 // pred_check
      _
    $region7: #{rnn_critic_forward.1} parent=1 // pred_check_branch
      %21 = sbr.rel (0) target = $region9
    $region8: #{rnn_critic_forward.1} parent=1 // pred_region
      _
    $region9: #{rnn_critic_forward.1} parent=1 // pred_fallthru
      _
    // Predicated region
    $region10: #{rnn_critic_forward.1} parent=1 // pred_check
      _
    $region11: #{rnn_critic_forward.1} parent=1 // pred_check_branch
      %23 = sbr.rel (0) target = $region13
    $region12: #{rnn_critic_forward.1} parent=1 // pred_region
      %s25 = ssub.s32 1152, 1152
      %26 = vsyncadd [#allocation4], %s25
      %s27 = sshll.u32 [#allocation3], 4
      %s28 = int_to_ptr.vmem [resolvable:$true] %s27
      %33 = dma.hbm_to_vmem [thread:$0]  %s2, 1152, %s28, [#allocation4], 128, 128, 8
    $region13: #{rnn_critic_forward.1} parent=1 // pred_fallthru
      _
    // Predicated region
    $region14: #{rnn_critic_forward.1} parent=1 // pred_check
      _
    $region15: #{rnn_critic_forward.1} parent=1 // pred_check_branch
      %35 = sbr.rel (0) target = $region17
    $region16: #{rnn_critic_forward.1} parent=1 // pred_region
      %s37 = ssub.s32 6144, 6144
      %38 = vsyncadd [#allocation6], %s37
      %s39 = sshll.u32 [#allocation5], 4
      %s40 = int_to_ptr.vmem [resolvable:$true] %s39
      %45 = dma.hbm_to_vmem [thread:$0]  %s3, 6144, %s40, [#allocation6], 384, 384, 24
    $region17: #{rnn_critic_forward.1} parent=1 // pred_fallthru
      _
    // Predicated region
    $region18: #{rnn_critic_forward.1} parent=1 // pred_check
      _
    $region19: #{rnn_critic_forward.1} parent=1 // pred_check_branch
      %47 = sbr.rel (0) target = $region21
    $region20: #{rnn_critic_forward.1} parent=1 // pred_region
      %s49 = ssub.s32 6144, 6144
      %50 = vsyncadd [#allocation6], %s49
      %s51 = sshll.u32 [#allocation7], 4
      %s52 = int_to_ptr.vmem [resolvable:$true] %s51
      %57 = dma.hbm_to_vmem [thread:$0]  %s4, 6144, %s52, [#allocation6], 384, 384, 24
    $region21: #{rnn_critic_forward.1} parent=1 // pred_fallthru
      _
    // Predicated region
    $region22: #{rnn_critic_forward.1} parent=1 // pred_check
      _
    $region23: #{rnn_critic_forward.1} parent=1 // pred_check_branch
      %59 = sbr.rel (0) target = $region25
    $region24: #{rnn_critic_forward.1} parent=1 // pred_region
      _
    $region25: #{rnn_critic_forward.1} parent=1 // pred_fallthru
      _
    // Predicated region
    $region26: #{rnn_critic_forward.1} parent=1 // pred_check
      _
    $region27: #{rnn_critic_forward.1} parent=1 // pred_check_branch
      %61 = sbr.rel (0) target = $region29
    $region28: #{rnn_critic_forward.1} parent=1 // pred_region
      _
    $region29: #{rnn_critic_forward.1} parent=1 // pred_fallthru
      _
    // Predicated region
    $region30: #{rnn_critic_forward.1} parent=1 // pred_check
      _
    $region31: #{rnn_critic_forward.1} parent=1 // pred_check_branch
      %63 = sbr.rel (0) target = $region33
    $region32: #{rnn_critic_forward.1} parent=1 // pred_region
      _
    $region33: #{rnn_critic_forward.1} parent=1 // pred_fallthru
      _
    // Predicated region
    $region34: #{rnn_critic_forward.1} parent=1 // pred_check
      _
    $region35: #{rnn_critic_forward.1} parent=1 // pred_check_branch
      %65 = sbr.rel (0) target = $region37
    $region36: #{rnn_critic_forward.1} parent=1 // pred_region
      %66 = dma.done [#allocation4], 1152
    $region37: #{rnn_critic_forward.1} parent=1 // pred_fallthru
      _
    // Predicated region
    $region38: #{rnn_critic_forward.1} parent=1 // pred_check
      _
    $region39: #{rnn_critic_forward.1} parent=1 // pred_check_branch
      %68 = sbr.rel (0) target = $region41
    $region40: #{rnn_critic_forward.1} parent=1 // pred_region
      %69 = dma.done [#allocation6], 6144
    $region41: #{rnn_critic_forward.1} parent=1 // pred_fallthru
      _
    // Predicated region
    $region42: #{rnn_critic_forward.1} parent=1 // pred_check
      _
    $region43: #{rnn_critic_forward.1} parent=1 // pred_check_branch
      %71 = sbr.rel (0) target = $region45
    $region44: #{rnn_critic_forward.1} parent=1 // pred_region
      %72 = dma.done [#allocation6], 6144
    $region45: #{rnn_critic_forward.1} parent=1 // pred_fallthru
      _
    %v73 = vld [vmem:[%s0] sm:$0xff]
    %v74 = vld [vmem:[%s1] sm:$0xff]
    %v75 = vld [vmem:[%s6] sm:$0x1]
    %v76 = vld [vmem:[%s6 + $0x1] sm:$0x1]
    %v77 = vld [vmem:[%s6 + $0x2] sm:$0x1]
    %v78 = vld [vmem:[%s6 + $0x3] sm:$0x1]
    %v79 = vld [vmem:[%s6 + $0x4] sm:$0x1]
    %v80 = vld [vmem:[%s5] ss:$2 sm:$0x7]
    %s81 = scalar_lea.vmem %s5, 1
    %v82 = vld [vmem:[%s81] ss:$2 sm:$0x7]
    %v83 = vld [vmem:[#allocation3] sm:$0xff]
    %v84 = vld [vmem:[#allocation3 + $0x8] sm:$0xff]
    %v85 = vld [vmem:[#allocation3 + $0x10] sm:$0xff]
    %v86 = vld [vmem:[#allocation3 + $0x18] sm:$0xff]
    %v87 = vld [vmem:[#allocation3 + $0x20] sm:$0xff]
    %v88 = vld [vmem:[#allocation3 + $0x28] sm:$0xff]
    %v89 = vld [vmem:[#allocation3 + $0x30] sm:$0xff]
    %v90 = vld [vmem:[#allocation3 + $0x38] sm:$0xff]
    %v91 = vld [vmem:[#allocation3 + $0x40] sm:$0xff]
    %v92 = vlaneseq
    %v93 = vshrl.u32 %v92, 7
    %v94 = vsub.s32 0, %v93
    %v95 = vrot.slane %v75, %v94
    %vm96 = vcmask 588800
    %v98 = vsel %vm96, %v73, 0
    %100 = vmatprep.subr.mxu0 0.0
    %101 = vmatpush1.msra.mxu0 %v83
    %102 = vmatprep.subr.mxu0 0.0
    %103 = vmatpush1.msra.mxu0 %v84
    %104 = vmatprep.subr.mxu0 0.0
    %105 = vmatpush1.msra.mxu0 %v85
    %106 = vmatprep.subr.mxu0 0.0
    %107 = vmatpush1.msra.mxu0 %v86
    %108 = vmatprep.subr.mxu0 0.0
    %109 = vmatpush1.msra.mxu0 %v87
    %110 = vmatprep.subr.mxu0 0.0
    %111 = vmatpush1.msra.mxu0 %v88
    %112 = vmatprep.subr.mxu0 0.0
    %113 = vmatpush1.msra.mxu0 %v89
    %114 = vmatprep.subr.mxu0 0.0
    %115 = vmatpush1.msra.mxu0 %v90
    %116 = vmatprep.subr.mxu0 0.0
    %117 = vmatpush1.msra.mxu0 %v91
    %118 = vmatprep.subr.mxu0 0.0
    %119 = vmatpush1.msra.mxu0 0.0
    %120 = vmatprep.subr.mxu0 0.0
    %121 = vmatpush1.msra.mxu0 0.0
    %122 = vmatprep.subr.mxu0 0.0
    %123 = vmatpush1.msra.mxu0 0.0
    %124 = vmatprep.subr.mxu0 0.0
    %125 = vmatpush1.msra.mxu0 0.0
    %126 = vmatprep.subr.mxu0 0.0
    %127 = vmatpush1.msra.mxu0 0.0
    %128 = vmatprep.subr.mxu0 0.0
    %129 = vmatpush1.msra.mxu0 0.0
    %130 = vmatprep.subr.mxu0 0.0
    %131 = vmatpush1.msra.mxu0 0.0
    %132 = vmatprep.subr.mxu0 0.0
    %133 = vmatpush1.msra.mxu0 0.0
    %134 = vmatprep.subr.mxu0 0.0
    %135 = vmatpush1.msra.mxu0 0.0
    %136 = vmatprep.subr.mxu0 0.0
    %137 = vmatpush1.msra.mxu0 0.0
    %138 = vmatprep.subr.mxu0 0.0
    %139 = vmatpush1.msra.mxu0 0.0
    %140 = vmatprep.subr.mxu0 0.0
    %141 = vmatpush1.msra.mxu0 0.0
    %142 = vmatprep.subr.mxu0 0.0
    %143 = vmatpush1.msra.mxu0 0.0
    %144 = vmatprep.subr.mxu0 0.0
    %145 = vmatpush1.msra.mxu0 0.0
    %146 = vmatprep.subr.mxu0 0.0
    %147 = vmatpush1.msra.mxu0 0.0
    %148 = vmatprep.subr.mxu0 0.0
    %149 = vmatpush1.msra.mxu0 0.0
    %150 = vmatprep.subr.mxu0 0.0
    %151 = vmatpush1.msra.mxu0 0.0
    %152 = vmatprep.subr.mxu0 0.0
    %153 = vmatpush1.msra.mxu0 0.0
    %154 = vmatprep.subr.mxu0 0.0
    %155 = vmatpush1.msra.mxu0 0.0
    %156 = vmatprep.subr.mxu0 0.0
    %157 = vmatpush1.msra.mxu0 0.0
    %158 = vmatprep.subr.mxu0 0.0
    %159 = vmatpush1.msra.mxu0 0.0
    %160 = vmatprep.subr.mxu0 0.0
    %161 = vmatpush1.msra.mxu0 0.0
    %162 = vmatprep.subr.mxu0 0.0
    %163 = vmatpush1.msra.mxu0 0.0
    %164 = vmatprep.mubr.f32.mxu0 0.0
    %165 = vmatmul.mubr.f32.gmra.mrb[0].mxu0 %v98
    %v166 = vpop.f32.mrb[0].mxu0
    %v167 = vadd.f32 %v95, %v166
    %v168 = vpop.f32.mrb[0].mxu0
    %169 = vdwg.mxu0
    %v170 = vmax.f32 %v167, 0.0
    %v171 = vld [vmem:[#allocation5] sm:$0xff]
    %v172 = vld [vmem:[#allocation5 + $0x8] sm:$0xff]
    %v173 = vld [vmem:[#allocation5 + $0x10] sm:$0xff]
    %v174 = vld [vmem:[#allocation5 + $0x18] sm:$0xff]
    %v175 = vld [vmem:[#allocation5 + $0x20] sm:$0xff]
    %v176 = vld [vmem:[#allocation5 + $0x28] sm:$0xff]
    %v177 = vld [vmem:[#allocation5 + $0x30] sm:$0xff]
    %v178 = vld [vmem:[#allocation5 + $0x38] sm:$0xff]
    %v179 = vld [vmem:[#allocation5 + $0x40] sm:$0xff]
    %v180 = vld [vmem:[#allocation5 + $0x48] sm:$0xff]
    %v181 = vld [vmem:[#allocation5 + $0x50] sm:$0xff]
    %v182 = vld [vmem:[#allocation5 + $0x58] sm:$0xff]
    %v183 = vld [vmem:[#allocation5 + $0x60] sm:$0xff]
    %v184 = vld [vmem:[#allocation5 + $0x68] sm:$0xff]
    %v185 = vld [vmem:[#allocation5 + $0x70] sm:$0xff]
    %v186 = vld [vmem:[#allocation5 + $0x78] sm:$0xff]
    %v187 = vld [vmem:[#allocation5 + $0x80] sm:$0xff]
    %v188 = vld [vmem:[#allocation5 + $0x88] sm:$0xff]
    %v189 = vld [vmem:[#allocation5 + $0x90] sm:$0xff]
    %v190 = vld [vmem:[#allocation5 + $0x98] sm:$0xff]
    %v191 = vld [vmem:[#allocation5 + $0xa0] sm:$0xff]
    %v192 = vld [vmem:[#allocation5 + $0xa8] sm:$0xff]
    %v193 = vld [vmem:[#allocation5 + $0xb0] sm:$0xff]
    %v194 = vld [vmem:[#allocation5 + $0xb8] sm:$0xff]
    %v195 = vld [vmem:[#allocation5 + $0xc0] sm:$0xff]
    %v196 = vld [vmem:[#allocation5 + $0xc8] sm:$0xff]
    %v197 = vld [vmem:[#allocation5 + $0xd0] sm:$0xff]
    %v198 = vld [vmem:[#allocation5 + $0xd8] sm:$0xff]
    %v199 = vld [vmem:[#allocation5 + $0xe0] sm:$0xff]
    %v200 = vld [vmem:[#allocation5 + $0xe8] sm:$0xff]
    %v201 = vld [vmem:[#allocation5 + $0xf0] sm:$0xff]
    %v202 = vld [vmem:[#allocation5 + $0xf8] sm:$0xff]
    %v203 = vld [vmem:[#allocation5 + $0x100] sm:$0xff]
    %v204 = vld [vmem:[#allocation5 + $0x108] sm:$0xff]
    %v205 = vld [vmem:[#allocation5 + $0x110] sm:$0xff]
    %v206 = vld [vmem:[#allocation5 + $0x118] sm:$0xff]
    %v207 = vld [vmem:[#allocation5 + $0x120] sm:$0xff]
    %v208 = vld [vmem:[#allocation5 + $0x128] sm:$0xff]
    %v209 = vld [vmem:[#allocation5 + $0x130] sm:$0xff]
    %v210 = vld [vmem:[#allocation5 + $0x138] sm:$0xff]
    %v211 = vld [vmem:[#allocation5 + $0x140] sm:$0xff]
    %v212 = vld [vmem:[#allocation5 + $0x148] sm:$0xff]
    %v213 = vld [vmem:[#allocation5 + $0x150] sm:$0xff]
    %v214 = vld [vmem:[#allocation5 + $0x158] sm:$0xff]
    %v215 = vld [vmem:[#allocation5 + $0x160] sm:$0xff]
    %v216 = vld [vmem:[#allocation5 + $0x168] sm:$0xff]
    %v217 = vld [vmem:[#allocation5 + $0x170] sm:$0xff]
    %v218 = vld [vmem:[#allocation5 + $0x178] sm:$0xff]
    %v220 = vlaneseq
    %v221 = vshrl.u32 %v220, 7
    %v222 = vsub.s32 0, %v221
    %v223 = vrot.slane %v80, %v222
    %v224 = vlaneseq
    %v225 = vshrl.u32 %v224, 7
    %v226 = vsub.s32 1, %v225
    %v227 = vrot.slane %v80, %v226
    %v228 = vlaneseq
    %v229 = vshrl.u32 %v228, 7
    %v230 = vsub.s32 2, %v229
    %v231 = vrot.slane %v80, %v230
    %235 = vmatprep.subr.mxu0 %v172
    %236 = vmatpush1.msra.mxu0 %v171
    %237 = vmatprep.subr.mxu0 %v175
    %238 = vmatpush1.msra.mxu0 %v174
    %239 = vmatprep.subr.mxu0 %v178
    %240 = vmatpush1.msra.mxu0 %v177
    %241 = vmatprep.subr.mxu0 %v181
    %242 = vmatpush1.msra.mxu0 %v180
    %243 = vmatprep.subr.mxu0 %v184
    %244 = vmatpush1.msra.mxu0 %v183
    %245 = vmatprep.subr.mxu0 %v187
    %246 = vmatpush1.msra.mxu0 %v186
    %247 = vmatprep.subr.mxu0 %v190
    %248 = vmatpush1.msra.mxu0 %v189
    %249 = vmatprep.subr.mxu0 %v193
    %250 = vmatpush1.msra.mxu0 %v192
    %251 = vmatprep.subr.mxu0 %v196
    %252 = vmatpush1.msra.mxu0 %v195
    %253 = vmatprep.subr.mxu0 %v199
    %254 = vmatpush1.msra.mxu0 %v198
    %255 = vmatprep.subr.mxu0 %v202
    %256 = vmatpush1.msra.mxu0 %v201
    %257 = vmatprep.subr.mxu0 %v205
    %258 = vmatpush1.msra.mxu0 %v204
    %259 = vmatprep.subr.mxu0 %v208
    %260 = vmatpush1.msra.mxu0 %v207
    %261 = vmatprep.subr.mxu0 %v211
    %262 = vmatpush1.msra.mxu0 %v210
    %263 = vmatprep.subr.mxu0 %v214
    %264 = vmatpush1.msra.mxu0 %v213
    %265 = vmatprep.subr.mxu0 %v217
    %266 = vmatpush1.msra.mxu0 %v216
    %267 = vmatprep.subr.mxu0 0.0
    %268 = vmatpush1.msra.mxu0 0.0
    %269 = vmatprep.subr.mxu0 0.0
    %270 = vmatpush1.msra.mxu0 0.0
    %271 = vmatprep.subr.mxu0 0.0
    %272 = vmatpush1.msra.mxu0 0.0
    %273 = vmatprep.subr.mxu0 0.0
    %274 = vmatpush1.msra.mxu0 0.0
    %275 = vmatprep.subr.mxu0 0.0
    %276 = vmatpush1.msra.mxu0 0.0
    %277 = vmatprep.subr.mxu0 0.0
    %278 = vmatpush1.msra.mxu0 0.0
    %279 = vmatprep.subr.mxu0 0.0
    %280 = vmatpush1.msra.mxu0 0.0
    %281 = vmatprep.subr.mxu0 0.0
    %282 = vmatpush1.msra.mxu0 0.0
    %283 = vmatprep.subr.mxu0 0.0
    %284 = vmatpush1.msra.mxu0 0.0
    %285 = vmatprep.subr.mxu0 0.0
    %286 = vmatpush1.msra.mxu0 0.0
    %287 = vmatprep.subr.mxu0 0.0
    %288 = vmatpush1.msra.mxu0 0.0
    %289 = vmatprep.subr.mxu0 0.0
    %290 = vmatpush1.msra.mxu0 0.0
    %291 = vmatprep.subr.mxu0 0.0
    %292 = vmatpush1.msra.mxu0 0.0
    %293 = vmatprep.subr.mxu0 0.0
    %294 = vmatpush1.msra.mxu0 0.0
    %295 = vmatprep.subr.mxu0 0.0
    %296 = vmatpush1.msra.mxu0 0.0
    %297 = vmatprep.subr.mxu0 0.0
    %298 = vmatpush1.msra.mxu0 0.0
    %299 = vmatprep.mubr.f32.mxu0 0.0
    %300 = vmatmul.mubr.f32.gmra.mrb[0].mxu0 %v170
    %v301 = vpop.f32.mrb[0].mxu0
    %v302 = vadd.f32 %v223, %v301
    %v303 = vpop.f32.mrb[0].mxu0
    %v304 = vadd.f32 %v227, %v303
    %305 = vdwg.mxu0
    %306 = vmatprep.subr.mxu0 0.0
    %307 = vmatpush1.msra.mxu0 %v173
    %308 = vmatprep.subr.mxu0 0.0
    %309 = vmatpush1.msra.mxu0 %v176
    %310 = vmatprep.subr.mxu0 0.0
    %311 = vmatpush1.msra.mxu0 %v179
    %312 = vmatprep.subr.mxu0 0.0
    %313 = vmatpush1.msra.mxu0 %v182
    %314 = vmatprep.subr.mxu0 0.0
    %315 = vmatpush1.msra.mxu0 %v185
    %316 = vmatprep.subr.mxu0 0.0
    %317 = vmatpush1.msra.mxu0 %v188
    %318 = vmatprep.subr.mxu0 0.0
    %319 = vmatpush1.msra.mxu0 %v191
    %320 = vmatprep.subr.mxu0 0.0
    %321 = vmatpush1.msra.mxu0 %v194
    %322 = vmatprep.subr.mxu0 0.0
    %323 = vmatpush1.msra.mxu0 %v197
    %324 = vmatprep.subr.mxu0 0.0
    %325 = vmatpush1.msra.mxu0 %v200
    %326 = vmatprep.subr.mxu0 0.0
    %327 = vmatpush1.msra.mxu0 %v203
    %328 = vmatprep.subr.mxu0 0.0
    %329 = vmatpush1.msra.mxu0 %v206
    %330 = vmatprep.subr.mxu0 0.0
    %331 = vmatpush1.msra.mxu0 %v209
    %332 = vmatprep.subr.mxu0 0.0
    %333 = vmatpush1.msra.mxu0 %v212
    %334 = vmatprep.subr.mxu0 0.0
    %335 = vmatpush1.msra.mxu0 %v215
    %336 = vmatprep.subr.mxu0 0.0
    %337 = vmatpush1.msra.mxu0 %v218
    %338 = vmatprep.subr.mxu0 0.0
    %339 = vmatpush1.msra.mxu0 0.0
    %340 = vmatprep.subr.mxu0 0.0
    %341 = vmatpush1.msra.mxu0 0.0
    %342 = vmatprep.subr.mxu0 0.0
    %343 = vmatpush1.msra.mxu0 0.0
    %344 = vmatprep.subr.mxu0 0.0
    %345 = vmatpush1.msra.mxu0 0.0
    %346 = vmatprep.subr.mxu0 0.0
    %347 = vmatpush1.msra.mxu0 0.0
    %348 = vmatprep.subr.mxu0 0.0
    %349 = vmatpush1.msra.mxu0 0.0
    %350 = vmatprep.subr.mxu0 0.0
    %351 = vmatpush1.msra.mxu0 0.0
    %352 = vmatprep.subr.mxu0 0.0
    %353 = vmatpush1.msra.mxu0 0.0
    %354 = vmatprep.subr.mxu0 0.0
    %355 = vmatpush1.msra.mxu0 0.0
    %356 = vmatprep.subr.mxu0 0.0
    %357 = vmatpush1.msra.mxu0 0.0
    %358 = vmatprep.subr.mxu0 0.0
    %359 = vmatpush1.msra.mxu0 0.0
    %360 = vmatprep.subr.mxu0 0.0
    %361 = vmatpush1.msra.mxu0 0.0
    %362 = vmatprep.subr.mxu0 0.0
    %363 = vmatpush1.msra.mxu0 0.0
    %364 = vmatprep.subr.mxu0 0.0
    %365 = vmatpush1.msra.mxu0 0.0
    %366 = vmatprep.subr.mxu0 0.0
    %367 = vmatpush1.msra.mxu0 0.0
    %368 = vmatprep.subr.mxu0 0.0
    %369 = vmatpush1.msra.mxu0 0.0
    %370 = vmatprep.mubr.f32.mxu0 0.0
    %371 = vmatmul.mubr.f32.gmra.mrb[0].mxu0 %v170
    %v372 = vpop.f32.mrb[0].mxu0
    %v373 = vadd.f32 %v231, %v372
    %v374 = vpop.f32.mrb[0].mxu0
    %375 = vdwg.mxu0
    %v376 = vld [vmem:[#allocation7] sm:$0xff]
    %v377 = vld [vmem:[#allocation7 + $0x8] sm:$0xff]
    %v378 = vld [vmem:[#allocation7 + $0x10] sm:$0xff]
    %v379 = vld [vmem:[#allocation7 + $0x18] sm:$0xff]
    %v380 = vld [vmem:[#allocation7 + $0x20] sm:$0xff]
    %v381 = vld [vmem:[#allocation7 + $0x28] sm:$0xff]
    %v382 = vld [vmem:[#allocation7 + $0x30] sm:$0xff]
    %v383 = vld [vmem:[#allocation7 + $0x38] sm:$0xff]
    %v384 = vld [vmem:[#allocation7 + $0x40] sm:$0xff]
    %v385 = vld [vmem:[#allocation7 + $0x48] sm:$0xff]
    %v386 = vld [vmem:[#allocation7 + $0x50] sm:$0xff]
    %v387 = vld [vmem:[#allocation7 + $0x58] sm:$0xff]
    %v388 = vld [vmem:[#allocation7 + $0x60] sm:$0xff]
    %v389 = vld [vmem:[#allocation7 + $0x68] sm:$0xff]
    %v390 = vld [vmem:[#allocation7 + $0x70] sm:$0xff]
    %v391 = vld [vmem:[#allocation7 + $0x78] sm:$0xff]
    %v392 = vld [vmem:[#allocation7 + $0x80] sm:$0xff]
    %v393 = vld [vmem:[#allocation7 + $0x88] sm:$0xff]
    %v394 = vld [vmem:[#allocation7 + $0x90] sm:$0xff]
    %v395 = vld [vmem:[#allocation7 + $0x98] sm:$0xff]
    %v396 = vld [vmem:[#allocation7 + $0xa0] sm:$0xff]
    %v397 = vld [vmem:[#allocation7 + $0xa8] sm:$0xff]
    %v398 = vld [vmem:[#allocation7 + $0xb0] sm:$0xff]
    %v399 = vld [vmem:[#allocation7 + $0xb8] sm:$0xff]
    %v400 = vld [vmem:[#allocation7 + $0xc0] sm:$0xff]
    %v401 = vld [vmem:[#allocation7 + $0xc8] sm:$0xff]
    %v402 = vld [vmem:[#allocation7 + $0xd0] sm:$0xff]
    %v403 = vld [vmem:[#allocation7 + $0xd8] sm:$0xff]
    %v404 = vld [vmem:[#allocation7 + $0xe0] sm:$0xff]
    %v405 = vld [vmem:[#allocation7 + $0xe8] sm:$0xff]
    %v406 = vld [vmem:[#allocation7 + $0xf0] sm:$0xff]
    %v407 = vld [vmem:[#allocation7 + $0xf8] sm:$0xff]
    %v408 = vld [vmem:[#allocation7 + $0x100] sm:$0xff]
    %v409 = vld [vmem:[#allocation7 + $0x108] sm:$0xff]
    %v410 = vld [vmem:[#allocation7 + $0x110] sm:$0xff]
    %v411 = vld [vmem:[#allocation7 + $0x118] sm:$0xff]
    %v412 = vld [vmem:[#allocation7 + $0x120] sm:$0xff]
    %v413 = vld [vmem:[#allocation7 + $0x128] sm:$0xff]
    %v414 = vld [vmem:[#allocation7 + $0x130] sm:$0xff]
    %v415 = vld [vmem:[#allocation7 + $0x138] sm:$0xff]
    %v416 = vld [vmem:[#allocation7 + $0x140] sm:$0xff]
    %v417 = vld [vmem:[#allocation7 + $0x148] sm:$0xff]
    %v418 = vld [vmem:[#allocation7 + $0x150] sm:$0xff]
    %v419 = vld [vmem:[#allocation7 + $0x158] sm:$0xff]
    %v420 = vld [vmem:[#allocation7 + $0x160] sm:$0xff]
    %v421 = vld [vmem:[#allocation7 + $0x168] sm:$0xff]
    %v422 = vld [vmem:[#allocation7 + $0x170] sm:$0xff]
    %v423 = vld [vmem:[#allocation7 + $0x178] sm:$0xff]
    %v425 = vlaneseq
    %v426 = vshrl.u32 %v425, 7
    %v427 = vsub.s32 0, %v426
    %v428 = vrot.slane %v82, %v427
    %v429 = vlaneseq
    %v430 = vshrl.u32 %v429, 7
    %v431 = vsub.s32 1, %v430
    %v432 = vrot.slane %v82, %v431
    %v433 = vlaneseq
    %v434 = vshrl.u32 %v433, 7
    %v435 = vsub.s32 2, %v434
    %v436 = vrot.slane %v82, %v435
    %440 = vmatprep.subr.mxu0 %v377
    %441 = vmatpush1.msra.mxu0 %v376
    %442 = vmatprep.subr.mxu0 %v380
    %443 = vmatpush1.msra.mxu0 %v379
    %444 = vmatprep.subr.mxu0 %v383
    %445 = vmatpush1.msra.mxu0 %v382
    %446 = vmatprep.subr.mxu0 %v386
    %447 = vmatpush1.msra.mxu0 %v385
    %448 = vmatprep.subr.mxu0 %v389
    %449 = vmatpush1.msra.mxu0 %v388
    %450 = vmatprep.subr.mxu0 %v392
    %451 = vmatpush1.msra.mxu0 %v391
    %452 = vmatprep.subr.mxu0 %v395
    %453 = vmatpush1.msra.mxu0 %v394
    %454 = vmatprep.subr.mxu0 %v398
    %455 = vmatpush1.msra.mxu0 %v397
    %456 = vmatprep.subr.mxu0 %v401
    %457 = vmatpush1.msra.mxu0 %v400
    %458 = vmatprep.subr.mxu0 %v404
    %459 = vmatpush1.msra.mxu0 %v403
    %460 = vmatprep.subr.mxu0 %v407
    %461 = vmatpush1.msra.mxu0 %v406
    %462 = vmatprep.subr.mxu0 %v410
    %463 = vmatpush1.msra.mxu0 %v409
    %464 = vmatprep.subr.mxu0 %v413
    %465 = vmatpush1.msra.mxu0 %v412
    %466 = vmatprep.subr.mxu0 %v416
    %467 = vmatpush1.msra.mxu0 %v415
    %468 = vmatprep.subr.mxu0 %v419
    %469 = vmatpush1.msra.mxu0 %v418
    %470 = vmatprep.subr.mxu0 %v422
    %471 = vmatpush1.msra.mxu0 %v421
    %472 = vmatprep.subr.mxu0 0.0
    %473 = vmatpush1.msra.mxu0 0.0
    %474 = vmatprep.subr.mxu0 0.0
    %475 = vmatpush1.msra.mxu0 0.0
    %476 = vmatprep.subr.mxu0 0.0
    %477 = vmatpush1.msra.mxu0 0.0
    %478 = vmatprep.subr.mxu0 0.0
    %479 = vmatpush1.msra.mxu0 0.0
    %480 = vmatprep.subr.mxu0 0.0
    %481 = vmatpush1.msra.mxu0 0.0
    %482 = vmatprep.subr.mxu0 0.0
    %483 = vmatpush1.msra.mxu0 0.0
    %484 = vmatprep.subr.mxu0 0.0
    %485 = vmatpush1.msra.mxu0 0.0
    %486 = vmatprep.subr.mxu0 0.0
    %487 = vmatpush1.msra.mxu0 0.0
    %488 = vmatprep.subr.mxu0 0.0
    %489 = vmatpush1.msra.mxu0 0.0
    %490 = vmatprep.subr.mxu0 0.0
    %491 = vmatpush1.msra.mxu0 0.0
    %492 = vmatprep.subr.mxu0 0.0
    %493 = vmatpush1.msra.mxu0 0.0
    %494 = vmatprep.subr.mxu0 0.0
    %495 = vmatpush1.msra.mxu0 0.0
    %496 = vmatprep.subr.mxu0 0.0
    %497 = vmatpush1.msra.mxu0 0.0
    %498 = vmatprep.subr.mxu0 0.0
    %499 = vmatpush1.msra.mxu0 0.0
    %500 = vmatprep.subr.mxu0 0.0
    %501 = vmatpush1.msra.mxu0 0.0
    %502 = vmatprep.subr.mxu0 0.0
    %503 = vmatpush1.msra.mxu0 0.0
    %504 = vmatprep.mubr.f32.mxu0 0.0
    %505 = vmatmul.mubr.f32.gmra.mrb[0].mxu0 %v74
    %v506 = vpop.f32.mrb[0].mxu0
    %v507 = vadd.f32 %v428, %v506
    %v508 = vpop.f32.mrb[0].mxu0
    %v509 = vadd.f32 %v432, %v508
    %510 = vdwg.mxu0
    %511 = vmatprep.subr.mxu0 0.0
    %512 = vmatpush1.msra.mxu0 %v378
    %513 = vmatprep.subr.mxu0 0.0
    %514 = vmatpush1.msra.mxu0 %v381
    %515 = vmatprep.subr.mxu0 0.0
    %516 = vmatpush1.msra.mxu0 %v384
    %517 = vmatprep.subr.mxu0 0.0
    %518 = vmatpush1.msra.mxu0 %v387
    %519 = vmatprep.subr.mxu0 0.0
    %520 = vmatpush1.msra.mxu0 %v390
    %521 = vmatprep.subr.mxu0 0.0
    %522 = vmatpush1.msra.mxu0 %v393
    %523 = vmatprep.subr.mxu0 0.0
    %524 = vmatpush1.msra.mxu0 %v396
    %525 = vmatprep.subr.mxu0 0.0
    %526 = vmatpush1.msra.mxu0 %v399
    %527 = vmatprep.subr.mxu0 0.0
    %528 = vmatpush1.msra.mxu0 %v402
    %529 = vmatprep.subr.mxu0 0.0
    %530 = vmatpush1.msra.mxu0 %v405
    %531 = vmatprep.subr.mxu0 0.0
    %532 = vmatpush1.msra.mxu0 %v408
    %533 = vmatprep.subr.mxu0 0.0
    %534 = vmatpush1.msra.mxu0 %v411
    %535 = vmatprep.subr.mxu0 0.0
    %536 = vmatpush1.msra.mxu0 %v414
    %537 = vmatprep.subr.mxu0 0.0
    %538 = vmatpush1.msra.mxu0 %v417
    %539 = vmatprep.subr.mxu0 0.0
    %540 = vmatpush1.msra.mxu0 %v420
    %541 = vmatprep.subr.mxu0 0.0
    %542 = vmatpush1.msra.mxu0 %v423
    %543 = vmatprep.subr.mxu0 0.0
    %544 = vmatpush1.msra.mxu0 0.0
    %545 = vmatprep.subr.mxu0 0.0
    %546 = vmatpush1.msra.mxu0 0.0
    %547 = vmatprep.subr.mxu0 0.0
    %548 = vmatpush1.msra.mxu0 0.0
    %549 = vmatprep.subr.mxu0 0.0
    %550 = vmatpush1.msra.mxu0 0.0
    %551 = vmatprep.subr.mxu0 0.0
    %552 = vmatpush1.msra.mxu0 0.0
    %553 = vmatprep.subr.mxu0 0.0
    %554 = vmatpush1.msra.mxu0 0.0
    %555 = vmatprep.subr.mxu0 0.0
    %556 = vmatpush1.msra.mxu0 0.0
    %557 = vmatprep.subr.mxu0 0.0
    %558 = vmatpush1.msra.mxu0 0.0
    %559 = vmatprep.subr.mxu0 0.0
    %560 = vmatpush1.msra.mxu0 0.0
    %561 = vmatprep.subr.mxu0 0.0
    %562 = vmatpush1.msra.mxu0 0.0
    %563 = vmatprep.subr.mxu0 0.0
    %564 = vmatpush1.msra.mxu0 0.0
    %565 = vmatprep.subr.mxu0 0.0
    %566 = vmatpush1.msra.mxu0 0.0
    %567 = vmatprep.subr.mxu0 0.0
    %568 = vmatpush1.msra.mxu0 0.0
    %569 = vmatprep.subr.mxu0 0.0
    %570 = vmatpush1.msra.mxu0 0.0
    %571 = vmatprep.subr.mxu0 0.0
    %572 = vmatpush1.msra.mxu0 0.0
    %573 = vmatprep.subr.mxu0 0.0
    %574 = vmatpush1.msra.mxu0 0.0
    %575 = vmatprep.mubr.f32.mxu0 0.0
    %576 = vmatmul.mubr.f32.gmra.mrb[0].mxu0 %v74
    %v577 = vpop.f32.mrb[0].mxu0
    %v578 = vadd.f32 %v436, %v577
    %v579 = vpop.f32.mrb[0].mxu0
    %580 = vdwg.mxu0
    %v581 = vadd.f32 %v302, %v507
    %v582 = vxor.u32 %v581, 2147483648
    %v583 = vmul.f32 %v582, 1.442695
    %v584 = vpow.pop %v583
    %v585 = vadd.f32 %v584, 1.0
    %v586 = vrcp.pop %v585
    %v587 = vmul.f32 1.0, %v586
    %v588 = vadd.f32 %v304, %v509
    %v589 = vxor.u32 %v588, 2147483648
    %v590 = vmul.f32 %v589, 1.442695
    %v591 = vpow.pop %v590
    %v592 = vadd.f32 %v591, 1.0
    %v593 = vrcp.pop %v592
    %v594 = vmul.f32 1.0, %v593
    %v595 = vmul.f32 %v587, %v578
    %v596 = vadd.f32 %v373, %v595
    %v597 = vtanh.pop %v596
    %v598 = vsub.f32 1.0, %v594
    %v599 = vmul.f32 %v598, %v597
    %v600 = vmul.f32 %v594, %v74
    %v601 = vadd.f32 %v599, %v600
    %602 = vadd.xlane.f32.xlu0 %v601
    %v603 = vpop.xlane.xlu0 %602
    %v604 = vmul.f32 %v603, 0.03125
    %v605 = vsub.f32 %v601, %v604
    %v606 = vlaneseq
    %v607 = vshrl.u32 %v606, 7
    %v608 = vsub.s32 0, %v607
    %v609 = vrot.slane %v79, %v608
    %v610 = vmul.f32 %v605, %v609
    %v611 = vmul.f32 %v610, %v610
    %612 = vadd.xlane.f32.xlu0 %v611
    %v613 = vpop.xlane.xlu0 %612
    %v614 = vmul.f32 %v613, 0.03125
    %v615 = vadd.f32 %v614, 1e-05
    %v616 = vrsqrt.pop %v615
    %v617 = vmul.f32 %v610, %v616
    %v618 = vlaneseq
    %v619 = vshrl.u32 %v618, 7
    %v620 = vsub.s32 0, %v619
    %v621 = vrot.slane %v76, %v620
    %v622 = vmul.f32 %v617, %v621
    %v623 = vlaneseq
    %v624 = vshrl.u32 %v623, 7
    %v625 = vsub.s32 0, %v624
    %v626 = vrot.slane %v77, %v625
    %v627 = vadd.f32 %v622, %v626
    %v628 = vlaneseq
    %v629 = vshrl.u32 %v628, 7
    %v630 = vsub.s32 0, %v629
    %v631 = vrot.slane %v78, %v630
    %v632 = vmul.f32 %v627, %v631
    %633 = vadd.xlane.f32.xlu0 %v632
    %v634 = vpop.xlane.xlu0 %633
    %s635 = sld [smem:[#allocation2]]
    %v636 = vstv %s635
    %v637 = vadd.f32 %v634, %v636
    %vm638 = vcmask 7168
    %639 = vst.msk [vmem:[%s8] sm:$0xff] %vm638, %v637
    %640 = vst [vmem:[%s9] sm:$0xff] %v601
    // Predicated region
    $region46: #{rnn_critic_forward.1} parent=1 // pred_check
      _
    $region47: #{rnn_critic_forward.1} parent=1 // pred_check_branch
      %642 = sbr.rel (0) target = $region49
    $region48: #{rnn_critic_forward.1} parent=1 // pred_region
      _
    $region49: #{rnn_critic_forward.1} parent=1 // pred_fallthru
      _
    // Predicated region
    $region50: #{rnn_critic_forward.1} parent=1 // pred_check
      _
    $region51: #{rnn_critic_forward.1} parent=1 // pred_check_branch
      %644 = sbr.rel (0) target = $region53
    $region52: #{rnn_critic_forward.1} parent=1 // pred_region
      _
    $region53: #{rnn_critic_forward.1} parent=1 // pred_fallthru
      _
    // Predicated region
    $region54: #{rnn_critic_forward.1} parent=1 // pred_check
      _
    $region55: #{rnn_critic_forward.1} parent=1 // pred_check_branch
      %646 = sbr.rel (0) target = $region57
    $region56: #{rnn_critic_forward.1} parent=1 // pred_region
      _
    $region57: #{rnn_critic_forward.1} parent=1 // pred_fallthru
      _
    // Predicated region
    $region58: #{rnn_critic_forward.1} parent=1 // pred_check
      _
    $region59: #{rnn_critic_forward.1} parent=1 // pred_check_branch
      %648 = sbr.rel (0) target = $region61
    $region60: #{rnn_critic_forward.1} parent=1 // pred_region
      _
    $region61: #{rnn_critic_forward.1} parent=1 // pred_fallthru
      _
    %649 = vsyncpa [#allocation4], 1
    %650 = vsyncpa [#allocation6], 1

</llo_original>
